<compile_context>
chip_gen: v5e
topology: v5e:2x2
jax: 0.10.0
libtpu: 0.0.40
codegen_flags: <defaults>
</compile_context>

<pallas_src>
import math
from functools import partial

import jax
import jax.numpy as jnp
from jax.experimental import pallas as pl
from jax.experimental.pallas import tpu as pltpu

LOG2PI = math.log(2.0 * math.pi)

# Column bases of the two coupling NNs inside the packed (16, 128) weight block.
_NN_A_COL = 0
_NN_B_COL = 64
_HID = 10


def glow_kernel(x_ref, obj_ref, wp_ref, z_ref, objout_ref, *, matmul_dtype):
    # x_ref: (2, TN) features-major; obj_ref: (1, TN); wp_ref: (16, 128) packed weights.
    x = x_ref[...]
    x0 = x[0:1, :]           # feature 0 of the incoming tile
    x1 = x[1:2, :]           # feature 1
    obj = obj_ref[...]
    wp = wp_ref[...]

    def nn_fwd(z, c):
        # Packed layout (sublane rows 0:10 unless noted), column base c:
        #   cols c..c+9 : w2 (10,10)     col c+10 : w1 of Linear(1,10)
        #   col  c+11   : b1 (10,)       col c+12 : b2 (10,)
        #   col  c+13   : w3^T (10,) of Linear(10,1)     col c+14, row 0 : b3
        w2 = wp[0:_HID, c:c + _HID]              # (10, 10)
        w1 = wp[0:_HID, c + 10:c + 11]           # (10, 1)
        b1 = wp[0:_HID, c + 11:c + 12]           # (10, 1)
        b2 = wp[0:_HID, c + 12:c + 13]           # (10, 1)
        w3 = wp[0:_HID, c + 13:c + 14]           # (10, 1)
        b3 = wp[0:1, c + 14:c + 15]              # (1, 1)

        # Layer 1 (in_features=1): VPU broadcast FMA -- no wasteful K=1 MXU pass.
        h = jnp.maximum(w1 * z + b1, 0.0)                        # (10, TN)
        # Layer 2 (10x10): the single MXU matmul per coupling NN.
        h = jnp.dot(w2.astype(matmul_dtype), h.astype(matmul_dtype),
                    preferred_element_type=jnp.float32) + b2
        h = jnp.maximum(h, 0.0)                                  # (10, TN)
        # Layer 3 (out_features=1): VPU multiply + sublane (XLU) reduction.
        return jnp.sum(w3 * h, axis=0, keepdims=True) + b3       # (1, TN)

    # RevNetStep 1: Reverse(2) then AdditiveCoupling -> (x1, x0 + NN_a(x1))
    a_z1 = x1
    a_z2 = x0 + nn_fwd(x1, _NN_A_COL)
    # RevNetStep 2: Reverse(2) then AdditiveCoupling -> (a_z2, a_z1 + NN_b(a_z2))
    b_z1 = a_z2
    b_z2 = a_z1 + nn_fwd(a_z2, _NN_B_COL)

    # GaussianPrior (mean = 0, logsd = 0): logp summed over the 2 features.
    logp = -0.5 * (2.0 * LOG2PI + b_z1 * b_z1 + b_z2 * b_z2)     # (1, TN)

    objout_ref[...] = obj + logp
    # One full-block lane-dense store instead of two narrow sublane-sliced stores.
    z_ref[...] = jnp.concatenate([b_z1, b_z2], axis=0)


def init_params(key):
    """Two AdditiveCoupling NNs: Linear(1,10)->ReLU->Linear(10,10)->ReLU->Linear(10,1).
    Weights are PyTorch-shaped (out_features, in_features); biases are (out_features, 1)."""
    keys = jax.random.split(key, 12)

    def lin(kw, kb, out_f, in_f, scale=0.3):
        w = scale * jax.random.normal(kw, (out_f, in_f), dtype=jnp.float32)
        b = scale * jax.random.normal(kb, (out_f, 1), dtype=jnp.float32)
        return w, b

    w1a, b1a = lin(keys[0], keys[1], 10, 1)
    w2a, b2a = lin(keys[2], keys[3], 10, 10)
    w3a, b3a = lin(keys[4], keys[5], 1, 10)
    w1b, b1b = lin(keys[6], keys[7], 10, 1)
    w2b, b2b = lin(keys[8], keys[9], 10, 10)
    w3b, b3b = lin(keys[10], keys[11], 1, 10)
    return (w1a, b1a, w2a, b2a, w3a, b3a, w1b, b1b, w2b, b2b, w3b, b3b)


def pack_params(params):
    """Pack all 12 tiny weight/bias arrays into one (16, 128) f32 block."""
    (w1a, b1a, w2a, b2a, w3a, b3a, w1b, b1b, w2b, b2b, w3b, b3b) = params
    wp = jnp.zeros((16, 128), dtype=jnp.float32)

    def put(wp, c, w1, b1, w2, b2, w3, b3):
        wp = wp.at[0:_HID, c:c + _HID].set(w2)
        wp = wp.at[0:_HID, c + 10].set(w1.reshape(_HID))
        wp = wp.at[0:_HID, c + 11].set(b1.reshape(_HID))
        wp = wp.at[0:_HID, c + 12].set(b2.reshape(_HID))
        wp = wp.at[0:_HID, c + 13].set(w3.reshape(_HID))
        wp = wp.at[0, c + 14].set(b3[0, 0])
        return wp

    wp = put(wp, _NN_A_COL, w1a, b1a, w2a, b2a, w3a, b3a)
    wp = put(wp, _NN_B_COL, w1b, b1b, w2b, b2b, w3b, b3b)
    return wp


def _choose_tile_n(n, max_tile_n):
    """Big lane-dense tiles (amortize the ~0.35us per-step overhead), but keep
    >= 2 grid steps so dimension_semantics=("parallel",) uses both v7x cores."""
    t = max(128, min(max_tile_n, (n // 128) * 128)) if n >= 128 else 128
    if n >= 256 and pl.cdiv(n, t) < 2:
        t = max(128, ((n // 2) // 128) * 128)
    return t


def glow_forward(x_fm, objective, packed_w, *, tile_n=None, max_tile_n=8192,
                 matmul_dtype=jnp.float32):
    """x_fm: (2, N) f32 features-major (kept features-major end-to-end, so there
    are no host-side transposes). objective: (N,) f32. packed_w: pack_params(params).
    Returns (z (2, N) features-major, objective (N,))."""
    C, N = x_fm.shape
    assert C == 2
    if tile_n is None:
        tile_n = _choose_tile_n(N, max_tile_n)
    n_pad = pl.cdiv(N, tile_n) * tile_n

    obj_fm = objective.reshape(1, N)
    if n_pad != N:
        # Masked-tail alternative avoided for simplicity: zero-pad and slice off.
        x_fm = jnp.pad(x_fm, ((0, 0), (0, n_pad - N)))
        obj_fm = jnp.pad(obj_fm, ((0, 0), (0, n_pad - N)))

    grid = (n_pad // tile_n,)
    data2 = pl.BlockSpec((2, tile_n), lambda i: (0, i))
    data1 = pl.BlockSpec((1, tile_n), lambda i: (0, i))
    wspec = pl.BlockSpec(packed_w.shape, lambda i: (0, 0))   # resident weight block

    cost = pl.CostEstimate(
        flops=512 * n_pad,
        transcendentals=0,
        bytes_accessed=24 * n_pad + packed_w.size * 4,
    )

    z_fm, obj_out = pl.pallas_call(
        partial(glow_kernel, matmul_dtype=matmul_dtype),
        grid=grid,
        in_specs=[data2, data1, wspec],
        out_specs=[data2, data1],
        out_shape=[jax.ShapeDtypeStruct((2, n_pad), jnp.float32),
                   jax.ShapeDtypeStruct((1, n_pad), jnp.float32)],
        compiler_params=pltpu.CompilerParams(dimension_semantics=("parallel",)),
        cost_estimate=cost,
    )(x_fm, obj_fm, packed_w)

    if n_pad != N:
        z_fm = z_fm[:, :N]
        obj_out = obj_out[:, :N]
    return z_fm, obj_out.reshape(N)


def glow_reference(x_fm, objective, params):
    """Plain-JAX reference of the same flattened Glow forward pass (features-major)."""
    (w1a, b1a, w2a, b2a, w3a, b3a, w1b, b1b, w2b, b2b, w3b, b3b) = params

    def nn(z, w1, b1, w2, b2, w3, b3):   # z: (1, N)
        h = jnp.maximum(w1 @ z + b1, 0.0)
        h = jnp.maximum(w2 @ h + b2, 0.0)
        return w3 @ h + b3

    x0, x1 = x_fm[0:1, :], x_fm[1:2, :]
    a_z1, a_z2 = x1, x0 + nn(x1, w1a, b1a, w2a, b2a, w3a, b3a)
    b_z1, b_z2 = a_z2, a_z1 + nn(a_z2, w1b, b1b, w2b, b2b, w3b, b3b)
    z = jnp.concatenate([b_z1, b_z2], axis=0)
    logp = jnp.sum(-0.5 * (LOG2PI + z * z), axis=0)
    return z, objective + logp


if __name__ == "__main__":
    key = jax.random.PRNGKey(0)
    k_x, k_p = jax.random.split(key)

    N = 2048  # toy 2D flow: batch N, 2 features (kept features-major)
    x_fm = jax.random.normal(k_x, (2, N), dtype=jnp.float32)
    objective = jnp.zeros((N,), dtype=jnp.float32)
    params = init_params(k_p)
    packed_w = pack_params(params)

    # On v6e / v7x, matmul_dtype=jnp.bfloat16 halves MXU passes for the (10,10) dot.
    z, obj = glow_forward(x_fm, objective, packed_w, matmul_dtype=jnp.float32)
    z = jax.block_until_ready(z)
    obj = jax.block_until_ready(obj)

    z_ref, obj_ref = glow_reference(x_fm, objective, params)
    assert jnp.allclose(z, z_ref, rtol=5e-3, atol=5e-3), "z mismatch vs reference"
    assert jnp.allclose(obj, obj_ref, rtol=5e-3, atol=5e-3), "objective mismatch vs reference"

    print("KERNEL_OK")
</pallas_src>

<mosaic_0001>
module attributes {stable_mosaic.version = 11 : i64} {
  func.func @glow_kernel(%arg0: i32, %arg1: memref<2x1024xf32, #tpu.memory_space<vmem>>, %arg2: memref<1x1024xf32, #tpu.memory_space<vmem>>, %arg3: memref<16x128xf32, #tpu.memory_space<vmem>>, %arg4: memref<2x1024xf32, #tpu.memory_space<vmem>>, %arg5: memref<1x1024xf32, #tpu.memory_space<vmem>>) attributes {dimension_semantics = [#tpu.dimension_semantics<parallel>], iteration_bounds = array<i64: 2>, scalar_prefetch = 0 : i64, scratch_operands = 0 : i64, tpu.core_type = #tpu.core_type<tc>, window_params = [{transform_indices = @transform_0, window_bounds = array<i64: 2, 1024>}, {transform_indices = @transform_1, window_bounds = array<i64: 1, 1024>}, {pipeline_mode = #tpu.pipeline_mode<synchronous>, transform_indices = @transform_2, window_bounds = array<i64: 16, 128>}, {transform_indices = @transform_3, window_bounds = array<i64: 2, 1024>}, {transform_indices = @transform_4, window_bounds = array<i64: 1, 1024>}]} {
    %c0 = arith.constant 0 : index
    %c0_0 = arith.constant 0 : index
    %0 = vector.load %arg1[%c0, %c0_0] : memref<2x1024xf32, #tpu.memory_space<vmem>>, vector<2x1024xf32>
    %1 = vector.extract_strided_slice %0 {offsets = [0, 0], sizes = [1, 1024], strides = [1, 1]} : vector<2x1024xf32> to vector<1x1024xf32>
    %2 = vector.extract_strided_slice %0 {offsets = [1, 0], sizes = [1, 1024], strides = [1, 1]} : vector<2x1024xf32> to vector<1x1024xf32>
    %c0_1 = arith.constant 0 : index
    %c0_2 = arith.constant 0 : index
    %3 = vector.load %arg2[%c0_1, %c0_2] : memref<1x1024xf32, #tpu.memory_space<vmem>>, vector<1x1024xf32>
    %c0_3 = arith.constant 0 : index
    %c0_4 = arith.constant 0 : index
    %4 = vector.load %arg3[%c0_3, %c0_4] : memref<16x128xf32, #tpu.memory_space<vmem>>, vector<16x128xf32>
    %5 = vector.extract_strided_slice %4 {offsets = [0, 0], sizes = [10, 10], strides = [1, 1]} : vector<16x128xf32> to vector<10x10xf32>
    %6 = vector.extract_strided_slice %4 {offsets = [0, 10], sizes = [10, 1], strides = [1, 1]} : vector<16x128xf32> to vector<10x1xf32>
    %7 = vector.extract_strided_slice %4 {offsets = [0, 11], sizes = [10, 1], strides = [1, 1]} : vector<16x128xf32> to vector<10x1xf32>
    %8 = vector.extract_strided_slice %4 {offsets = [0, 12], sizes = [10, 1], strides = [1, 1]} : vector<16x128xf32> to vector<10x1xf32>
    %9 = vector.extract_strided_slice %4 {offsets = [0, 13], sizes = [10, 1], strides = [1, 1]} : vector<16x128xf32> to vector<10x1xf32>
    %10 = vector.extract_strided_slice %4 {offsets = [0, 14], sizes = [1, 1], strides = [1, 1]} : vector<16x128xf32> to vector<1x1xf32>
    %11 = vector.broadcast %6 : vector<10x1xf32> to vector<10x1024xf32>
    %12 = vector.broadcast %2 : vector<1x1024xf32> to vector<10x1024xf32>
    %13 = arith.mulf %11, %12 : vector<10x1024xf32>
    %14 = vector.broadcast %7 : vector<10x1xf32> to vector<10x1024xf32>
    %15 = arith.addf %13, %14 : vector<10x1024xf32>
    %cst = arith.constant 0.000000e+00 : f32
    %16 = vector.broadcast %cst : f32 to vector<10x1024xf32>
    %17 = arith.maximumf %15, %16 : vector<10x1024xf32>
    %cst_5 = arith.constant dense<0.000000e+00> : vector<10x1024xf32>
    %18 = tpu.matmul %5, %17, %cst_5 {dimension_numbers = #tpu.dot_dimension_numbers<[1], [0], [0], [1], [0, 0, 1, 1], [], []>} : vector<10x10xf32>, vector<10x1024xf32>, vector<10x1024xf32> -> vector<10x1024xf32>
    %19 = vector.broadcast %8 : vector<10x1xf32> to vector<10x1024xf32>
    %20 = arith.addf %18, %19 : vector<10x1024xf32>
    %cst_6 = arith.constant 0.000000e+00 : f32
    %21 = vector.broadcast %cst_6 : f32 to vector<10x1024xf32>
    %22 = arith.maximumf %20, %21 : vector<10x1024xf32>
    %23 = vector.broadcast %9 : vector<10x1xf32> to vector<10x1024xf32>
    %24 = arith.mulf %23, %22 : vector<10x1024xf32>
    %cst_7 = arith.constant dense<0.000000e+00> : vector<1024xf32>
    %25 = vector.multi_reduction <add>, %24, %cst_7 [0] : vector<10x1024xf32> to vector<1024xf32>
    %26 = vector.shape_cast %25 : vector<1024xf32> to vector<1x1024xf32>
    %27 = vector.broadcast %10 : vector<1x1xf32> to vector<1x1024xf32>
    %28 = arith.addf %26, %27 : vector<1x1024xf32>
    %29 = arith.addf %1, %28 : vector<1x1024xf32>
    %30 = vector.extract_strided_slice %4 {offsets = [0, 64], sizes = [10, 10], strides = [1, 1]} : vector<16x128xf32> to vector<10x10xf32>
    %31 = vector.extract_strided_slice %4 {offsets = [0, 74], sizes = [10, 1], strides = [1, 1]} : vector<16x128xf32> to vector<10x1xf32>
    %32 = vector.extract_strided_slice %4 {offsets = [0, 75], sizes = [10, 1], strides = [1, 1]} : vector<16x128xf32> to vector<10x1xf32>
    %33 = vector.extract_strided_slice %4 {offsets = [0, 76], sizes = [10, 1], strides = [1, 1]} : vector<16x128xf32> to vector<10x1xf32>
    %34 = vector.extract_strided_slice %4 {offsets = [0, 77], sizes = [10, 1], strides = [1, 1]} : vector<16x128xf32> to vector<10x1xf32>
    %35 = vector.extract_strided_slice %4 {offsets = [0, 78], sizes = [1, 1], strides = [1, 1]} : vector<16x128xf32> to vector<1x1xf32>
    %36 = vector.broadcast %31 : vector<10x1xf32> to vector<10x1024xf32>
    %37 = vector.broadcast %29 : vector<1x1024xf32> to vector<10x1024xf32>
    %38 = arith.mulf %36, %37 : vector<10x1024xf32>
    %39 = vector.broadcast %32 : vector<10x1xf32> to vector<10x1024xf32>
    %40 = arith.addf %38, %39 : vector<10x1024xf32>
    %cst_8 = arith.constant 0.000000e+00 : f32
    %41 = vector.broadcast %cst_8 : f32 to vector<10x1024xf32>
    %42 = arith.maximumf %40, %41 : vector<10x1024xf32>
    %cst_9 = arith.constant dense<0.000000e+00> : vector<10x1024xf32>
    %43 = tpu.matmul %30, %42, %cst_9 {dimension_numbers = #tpu.dot_dimension_numbers<[1], [0], [0], [1], [0, 0, 1, 1], [], []>} : vector<10x10xf32>, vector<10x1024xf32>, vector<10x1024xf32> -> vector<10x1024xf32>
    %44 = vector.broadcast %33 : vector<10x1xf32> to vector<10x1024xf32>
    %45 = arith.addf %43, %44 : vector<10x1024xf32>
    %cst_10 = arith.constant 0.000000e+00 : f32
    %46 = vector.broadcast %cst_10 : f32 to vector<10x1024xf32>
    %47 = arith.maximumf %45, %46 : vector<10x1024xf32>
    %48 = vector.broadcast %34 : vector<10x1xf32> to vector<10x1024xf32>
    %49 = arith.mulf %48, %47 : vector<10x1024xf32>
    %cst_11 = arith.constant dense<0.000000e+00> : vector<1024xf32>
    %50 = vector.multi_reduction <add>, %49, %cst_11 [0] : vector<10x1024xf32> to vector<1024xf32>
    %51 = vector.shape_cast %50 : vector<1024xf32> to vector<1x1024xf32>
    %52 = vector.broadcast %35 : vector<1x1xf32> to vector<1x1024xf32>
    %53 = arith.addf %51, %52 : vector<1x1024xf32>
    %54 = arith.addf %2, %53 : vector<1x1024xf32>
    %55 = arith.mulf %29, %29 : vector<1x1024xf32>
    %cst_12 = arith.constant 3.67575407 : f32
    %56 = vector.broadcast %cst_12 : f32 to vector<1x1024xf32>
    %57 = arith.addf %56, %55 : vector<1x1024xf32>
    %58 = arith.mulf %54, %54 : vector<1x1024xf32>
    %59 = arith.addf %57, %58 : vector<1x1024xf32>
    %cst_13 = arith.constant -5.000000e-01 : f32
    %60 = vector.broadcast %cst_13 : f32 to vector<1x1024xf32>
    %61 = arith.mulf %60, %59 : vector<1x1024xf32>
    %62 = arith.addf %3, %61 : vector<1x1024xf32>
    %c0_14 = arith.constant 0 : index
    %c0_15 = arith.constant 0 : index
    %63 = vector.load %arg5[%c0_14, %c0_15] : memref<1x1024xf32, #tpu.memory_space<vmem>>, vector<1x1024xf32>
    tpu.vector_store %arg5[%c0_14, %c0_15], %62 {strides = array<i32>} : memref<1x1024xf32, #tpu.memory_space<vmem>>, vector<1x1024xf32>,
    %64 = tpu.concatenate %29, %54 in 0 : vector<1x1024xf32>, vector<1x1024xf32> -> vector<2x1024xf32>
    %c0_16 = arith.constant 0 : index
    %c0_17 = arith.constant 0 : index
    %65 = vector.load %arg4[%c0_16, %c0_17] : memref<2x1024xf32, #tpu.memory_space<vmem>>, vector<2x1024xf32>
    tpu.vector_store %arg4[%c0_16, %c0_17], %64 {strides = array<i32>} : memref<2x1024xf32, #tpu.memory_space<vmem>>, vector<2x1024xf32>,
    return
  }
  func.func @transform_0(%arg0: i32) -> (i32, i32) {
    %c0_i32 = arith.constant 0 : i32
    %c0_i32_0 = arith.constant 0 : i32
    return %c0_i32, %arg0 : i32, i32
  }
  func.func @transform_1(%arg0: i32) -> (i32, i32) {
    %c0_i32 = arith.constant 0 : i32
    %c0_i32_0 = arith.constant 0 : i32
    return %c0_i32, %arg0 : i32, i32
  }
  func.func @transform_2(%arg0: i32) -> (i32, i32) {
    %c0_i32 = arith.constant 0 : i32
    %c0_i32_0 = arith.constant 0 : i32
    %c0_i32_1 = arith.constant 0 : i32
    return %c0_i32, %c0_i32_0 : i32, i32
  }
  func.func @transform_3(%arg0: i32) -> (i32, i32) {
    %c0_i32 = arith.constant 0 : i32
    %c0_i32_0 = arith.constant 0 : i32
    return %c0_i32, %arg0 : i32, i32
  }
  func.func @transform_4(%arg0: i32) -> (i32, i32) {
    %c0_i32 = arith.constant 0 : i32
    %c0_i32_0 = arith.constant 0 : i32
    return %c0_i32, %arg0 : i32, i32
  }
}

</mosaic_0001>

<llo_original>
// kernel: tpu_custom_call.1
$region0: #{tpu_custom_call.1}
  #allocation0 [shape = 'u32[]', space=smem, size = 0x4, offset = 0x4, fixed_abs, tag = 'smem constant byte address 0x4 - core index']
  #allocation1 [shape = 'u32[72,128]{1,0:T(1,128)}', space=vmem, size = 0x9000, scoped, tag = 'internal scratch']
  %s0 = inlined_call_operand.hbm [shape: f32[2,2048], index: 0, kind: input, shape index: {}]
  %s1 = inlined_call_operand.hbm [shape: f32[1,2048], index: 1, kind: input, shape index: {}]
  %s2 = inlined_call_operand.hbm [shape: f32[16,128], index: 2, kind: input, shape index: {}]
  %s3 = inlined_call_operand.hbm [shape: f32[2,2048], index: 3, kind: output, shape index: {0}]
  %s4 = inlined_call_operand.hbm [shape: f32[1,2048], index: 4, kind: output, shape index: {1}]
  %5 = xla_tuple %s3, %s4
  %s6 = sld [smem:[#allocation0]]
  $region65: #{tpu_custom_call.1} parent=0
    _
  %s8 = ssub.s32 1, %s6
  %s9 = scalar_select 0, %s8, %s6
  $region1: #{tpu_custom_call.1} parent=0
    #allocation2 [shape = 'u8[16384]{0}', space=vmem, size = 0x4000, scoped, tag = 'input window, operand 0']
    #allocation3 [shape = 's32[2]{0}', space=sflag, size = 0x8, scoped, tag = 'scoped memory for tpu_custom_call.1']
    #allocation4 [shape = 's32[2]{0}', space=sflag, size = 0x8, scoped, tag = 'scoped memory for tpu_custom_call.1']
    #allocation5 [shape = 'u8[8192]{0}', space=vmem, size = 0x2000, scoped, tag = 'input window, operand 1']
    #allocation6 [shape = 's32[2]{0}', space=sflag, size = 0x8, scoped, tag = 'scoped memory for tpu_custom_call.1']
    #allocation7 [shape = 'u8[8192]{0}', space=vmem, size = 0x2000, scoped, tag = 'input window, operand 2, single buffered']
    #allocation8 [shape = 'u8[16384]{0}', space=vmem, size = 0x4000, scoped, tag = 'output window, operand 0']
    #allocation9 [shape = 'u8[8192]{0}', space=vmem, size = 0x2000, scoped, tag = 'output window, operand 1']
    #allocation10 [shape = 's32[2]{0}', space=sflag, size = 0x8, scoped, tag = 'scoped memory for tpu_custom_call.1']
    %10 = vsyncpa [#allocation3], 0
    %s11 = scalar_lea.sflag [#allocation3], 1
    %12 = vsyncpa %s11, 0
    %13 = vsyncpa [#allocation6], 0
    %s14 = scalar_lea.sflag [#allocation6], 1
    %15 = vsyncpa %s14, 0
    %16 = vsyncpa [#allocation4], 0
    %s17 = scalar_lea.sflag [#allocation4], 1
    %18 = vsyncpa %s17, 0
    %19 = vsyncpa [#allocation10], 0
    %s20 = scalar_lea.sflag [#allocation10], 1
    %21 = vsyncpa %s20, 0
    loop: start=0, step=1, limit=4
    $region2: #{tpu_custom_call.1} parent=1 // loop_pre_header
      _
    $region3: #{tpu_custom_call.1} parent=1 // loop_header
      %s23 = sphi 0, %s27
      %p24 = scmp.ge.s32.totalorder %s23, 4
      %s33 = sphi 0, %s35
      %s36 = sphi 0, %s33
      %s37 = sphi 0, %s36
      %s53 = sphi 0, %s37
      %s59 = sphi 0, %s61
      %s62 = sphi 0, %s59
      %s63 = sphi 0, %s62
      %s79 = sphi 0, %s63
      %s83 = sphi 0, %s83
      %s85 = sphi 0, %s83
      %s86 = sphi 0, %s85
      %s100 = sphi 0, %s86
      %s106 = sphi 0, %s108
      %s109 = sphi 0, %s106
      %s110 = sphi 0, %s109
      %s126 = sphi 0, %s110
      %s132 = sphi 0, %s134
      %s135 = sphi 0, %s132
      %s136 = sphi 0, %s135
      %s152 = sphi 0, %s136
    $region4: #{tpu_custom_call.1} parent=1 // loop_header_branch
      %26 = sbr.rel (%p24) target = $region8
    $region5: #{tpu_custom_call.1} parent=1 // loop_body
      %s28 = ssub.s32 %s23, 1
      %s29 = ssub.s32 %s23, 2
      %s30 = sadd.s32 %s23, 1
      %s31 = ssub.s32 %s23, %s30
      %p32 = scmp.eq.s32.totalorder %s31, 0
      %s34 = sadd.s32 %s33, 1
      %s35 = scalar_select %p32, %s33, %s34
      %p38 = pneg %p32
      %p39 = scmp.eq.s32.totalorder %s23, 1
      %p40 = por %p38, %p39
      %p41 = scmp.ne.s32.totalorder %s33, %s36
      %p42 = scmp.eq.s32.totalorder %s23, 0
      %p43 = por %p41, %p42
      %p44 = scmp.ne.s32.totalorder %s33, %s36
      %p45 = scmp.eq.s32.totalorder %s28, 1
      %p46 = por %p44, %p45
      %p47 = scmp.ne.s32.totalorder %s36, %s37
      %p48 = scmp.eq.s32.totalorder %s28, 0
      %p49 = por %p47, %p48
      %p50 = scmp.ne.s32.totalorder %s36, %s37
      %p51 = scmp.eq.s32.totalorder %s29, 1
      %p52 = por %p50, %p51
      %p54 = scmp.ne.s32.totalorder %s37, %s53
      %p55 = scmp.eq.s32.totalorder %s29, 0
      %p56 = por %p54, %p55
      %s57 = ssub.s32 %s23, %s30
      %p58 = scmp.eq.s32.totalorder %s57, 0
      %s60 = sadd.s32 %s59, 1
      %s61 = scalar_select %p58, %s59, %s60
      %p64 = pneg %p58
      %p65 = scmp.eq.s32.totalorder %s23, 1
      %p66 = por %p64, %p65
      %p67 = scmp.ne.s32.totalorder %s59, %s62
      %p68 = scmp.eq.s32.totalorder %s23, 0
      %p69 = por %p67, %p68
      %p70 = scmp.ne.s32.totalorder %s59, %s62
      %p71 = scmp.eq.s32.totalorder %s28, 1
      %p72 = por %p70, %p71
      %p73 = scmp.ne.s32.totalorder %s62, %s63
      %p74 = scmp.eq.s32.totalorder %s28, 0
      %p75 = por %p73, %p74
      %p76 = scmp.ne.s32.totalorder %s62, %s63
      %p77 = scmp.eq.s32.totalorder %s29, 1
      %p78 = por %p76, %p77
      %p80 = scmp.ne.s32.totalorder %s63, %s79
      %p81 = scmp.eq.s32.totalorder %s29, 0
      %p82 = por %p80, %p81
      %s84 = sadd.s32 %s83, 1
      %p87 = scmp.eq.s32.totalorder %s23, 1
      %p88 = scmp.ne.s32.totalorder %s83, %s85
      %p89 = scmp.eq.s32.totalorder %s23, 0
      %p90 = por %p88, %p89
      %p91 = scmp.ne.s32.totalorder %s83, %s85
      %p92 = scmp.eq.s32.totalorder %s28, 1
      %p93 = por %p91, %p92
      %p94 = scmp.ne.s32.totalorder %s85, %s86
      %p95 = scmp.eq.s32.totalorder %s28, 0
      %p96 = por %p94, %p95
      %p97 = scmp.ne.s32.totalorder %s85, %s86
      %p98 = scmp.eq.s32.totalorder %s29, 1
      %p99 = por %p97, %p98
      %p101 = scmp.ne.s32.totalorder %s86, %s100
      %p102 = scmp.eq.s32.totalorder %s29, 0
      %p103 = por %p101, %p102
      %s104 = ssub.s32 %s23, %s30
      %p105 = scmp.eq.s32.totalorder %s104, 0
      %s107 = sadd.s32 %s106, 1
      %s108 = scalar_select %p105, %s106, %s107
      %p111 = pneg %p105
      %p112 = scmp.eq.s32.totalorder %s23, 1
      %p113 = por %p111, %p112
      %p114 = scmp.ne.s32.totalorder %s106, %s109
      %p115 = scmp.eq.s32.totalorder %s23, 0
      %p116 = por %p114, %p115
      %p117 = scmp.ne.s32.totalorder %s106, %s109
      %p118 = scmp.eq.s32.totalorder %s28, 1
      %p119 = por %p117, %p118
      %p120 = scmp.ne.s32.totalorder %s109, %s110
      %p121 = scmp.eq.s32.totalorder %s28, 0
      %p122 = por %p120, %p121
      %p123 = scmp.ne.s32.totalorder %s109, %s110
      %p124 = scmp.eq.s32.totalorder %s29, 1
      %p125 = por %p123, %p124
      %p127 = scmp.ne.s32.totalorder %s110, %s126
      %p128 = scmp.eq.s32.totalorder %s29, 0
      %p129 = por %p127, %p128
      %s130 = ssub.s32 %s23, %s30
      %p131 = scmp.eq.s32.totalorder %s130, 0
      %s133 = sadd.s32 %s132, 1
      %s134 = scalar_select %p131, %s132, %s133
      %p137 = pneg %p131
      %p138 = scmp.eq.s32.totalorder %s23, 1
      %p139 = por %p137, %p138
      %p140 = scmp.ne.s32.totalorder %s132, %s135
      %p141 = scmp.eq.s32.totalorder %s23, 0
      %p142 = por %p140, %p141
      %p143 = scmp.ne.s32.totalorder %s132, %s135
      %p144 = scmp.eq.s32.totalorder %s28, 1
      %p145 = por %p143, %p144
      %p146 = scmp.ne.s32.totalorder %s135, %s136
      %p147 = scmp.eq.s32.totalorder %s28, 0
      %p148 = por %p146, %p147
      %p149 = scmp.ne.s32.totalorder %s135, %s136
      %p150 = scmp.eq.s32.totalorder %s29, 1
      %p151 = por %p149, %p150
      %p153 = scmp.ne.s32.totalorder %s136, %s152
      %p154 = scmp.eq.s32.totalorder %s29, 0
      %p155 = por %p153, %p154
      %p156 = scmp.le.s32.totalorder 1, %s23
      %p157 = scmp.lt.s32.totalorder %s23, 3
      %p158 = pnand %p156, %p157
      %p159 = pneg %p158
      // Predicated region
      $region9: #{tpu_custom_call.1} parent=5 // pred_check
        _
      $region10: #{tpu_custom_call.1} parent=5 // pred_check_branch
        %161 = sbr.rel (%p158) target = $region12
      $region11: #{tpu_custom_call.1} parent=5 // pred_region
        %s162 = ssub.s32 %s23, 1
        // Predicated region
        $region13: #{tpu_custom_call.1} parent=11 // pred_check
          %p163 = pneg %p96
        $region14: #{tpu_custom_call.1} parent=11 // pred_check_branch
          %165 = sbr.rel (%p163) target = $region16
        $region15: #{tpu_custom_call.1} parent=11 // pred_region
          %167 = vsyncadd [#allocation6], 0
          %s168 = sshll.u32 %s2, 4
          %s169 = int_to_ptr.hbm [resolvable:$true] %s168
          %s170 = sshll.u32 [#allocation7], 4
          %s171 = int_to_ptr.vmem [resolvable:$true] %s170
          %176 = dma.hbm_to_vmem [thread:$0]  %s169, 256, %s171, [#allocation6], 128, 128, 8
        $region16: #{tpu_custom_call.1} parent=11 // pred_fallthru
          _
      $region12: #{tpu_custom_call.1} parent=5 // pred_fallthru
        _
      %p177 = scmp.lt.s32.totalorder %s23, 2
      // Predicated region
      $region17: #{tpu_custom_call.1} parent=5 // pred_check
        %p178 = pneg %p177
      $region18: #{tpu_custom_call.1} parent=5 // pred_check_branch
        %180 = sbr.rel (%p178) target = $region20
      $region19: #{tpu_custom_call.1} parent=5 // pred_region
        // Predicated region
        $region21: #{tpu_custom_call.1} parent=19 // pred_check
          %p181 = pneg %p43
        $region22: #{tpu_custom_call.1} parent=19 // pred_check_branch
          %183 = sbr.rel (%p181) target = $region24
        $region23: #{tpu_custom_call.1} parent=19 // pred_region
          %s184 = sand.u32 %s33, 1
          %s185 = scalar_lea.sflag [#allocation3], %s184
          %s186 = sand.u32 %s33, 1
          %s187 = smul.addr %s186, 16
          %s188 = scalar_lea.vmem [#allocation2], %s187
          %s189 = smul.u32 8, %s23
          %191 = vsyncadd %s185, 0
          %s192 = smul.addr %s189, 2
          %s193 = scalar_lea.hbm %s0, %s192
          %s195 = sshll.u32 %s193, 4
          %s196 = int_to_ptr.hbm [resolvable:$true] %s195
          %s197 = sshll.u32 %s188, 4
          %s198 = int_to_ptr.vmem [resolvable:$true] %s197
          %200 = dma.hbm_to_vmem [thread:$0]  %s196, 256, %s198, %s185
        $region24: #{tpu_custom_call.1} parent=19 // pred_fallthru
          _
        // Predicated region
        $region25: #{tpu_custom_call.1} parent=19 // pred_check
          %p201 = pneg %p69
        $region26: #{tpu_custom_call.1} parent=19 // pred_check_branch
          %203 = sbr.rel (%p201) target = $region28
        $region27: #{tpu_custom_call.1} parent=19 // pred_region
          %s204 = sand.u32 %s23, 1
          %s205 = scalar_lea.sflag [#allocation6], %s204
          %s206 = sand.u32 %s59, 1
          %s207 = smul.addr %s206, 8
          %s208 = scalar_lea.vmem [#allocation5], %s207
          %s209 = smul.u32 8, %s23
          %211 = vsyncadd %s205, 0
          %s212 = scalar_lea.hbm %s1, %s209
          %s214 = sshll.u32 %s212, 4
          %s215 = int_to_ptr.hbm [resolvable:$true] %s214
          %s216 = sshll.u32 %s208, 4
          %s217 = int_to_ptr.vmem [resolvable:$true] %s216
          %219 = dma.hbm_to_vmem [thread:$0]  %s215, 128, %s217, %s205
        $region28: #{tpu_custom_call.1} parent=19 // pred_fallthru
          _
      $region20: #{tpu_custom_call.1} parent=5 // pred_fallthru
        _
      %p220 = scmp.le.s32.totalorder 1, %s23
      %p221 = scmp.lt.s32.totalorder %s23, 3
      %p222 = pnand %p220, %p221
      %p223 = pneg %p222
      // Predicated region
      $region29: #{tpu_custom_call.1} parent=5 // pred_check
        _
      $region30: #{tpu_custom_call.1} parent=5 // pred_check_branch
        %225 = sbr.rel (%p222) target = $region32
      $region31: #{tpu_custom_call.1} parent=5 // pred_region
        %s226 = ssub.s32 %s23, 1
        %s227 = sand.u32 %s36, 1
        %s228 = scalar_lea.sflag [#allocation3], %s227
        %s229 = sand.u32 %s36, 1
        %s230 = smul.addr %s229, 16
        %s231 = scalar_lea.vmem [#allocation2], %s230
        // Predicated region
        $region33: #{tpu_custom_call.1} parent=31 // pred_check
          %p232 = pneg %p49
        $region34: #{tpu_custom_call.1} parent=31 // pred_check_branch
          %234 = sbr.rel (%p232) target = $region36
        $region35: #{tpu_custom_call.1} parent=31 // pred_region
          %236 = dma.done %s228, 256
        $region36: #{tpu_custom_call.1} parent=31 // pred_fallthru
          _
        %s237 = sand.u32 %s28, 1
        %s238 = scalar_lea.sflag [#allocation6], %s237
        %s239 = sand.u32 %s62, 1
        %s240 = smul.addr %s239, 8
        %s241 = scalar_lea.vmem [#allocation5], %s240
        // Predicated region
        $region37: #{tpu_custom_call.1} parent=31 // pred_check
          %p242 = pneg %p75
        $region38: #{tpu_custom_call.1} parent=31 // pred_check_branch
          %244 = sbr.rel (%p242) target = $region40
        $region39: #{tpu_custom_call.1} parent=31 // pred_region
          %246 = dma.done %s238, 128
        $region40: #{tpu_custom_call.1} parent=31 // pred_fallthru
          _
        // Predicated region
        $region41: #{tpu_custom_call.1} parent=31 // pred_check
          %p247 = pneg %p96
        $region42: #{tpu_custom_call.1} parent=31 // pred_check_branch
          %249 = sbr.rel (%p247) target = $region44
        $region43: #{tpu_custom_call.1} parent=31 // pred_region
          %251 = dma.done [#allocation6], 256
        $region44: #{tpu_custom_call.1} parent=31 // pred_fallthru
          _
        %s252 = sand.u32 %s36, 1
        %s253 = scalar_lea.sflag [#allocation3], %s252
        %s254 = sand.u32 %s36, 1
        %s255 = smul.addr %s254, 16
        %s256 = scalar_lea.vmem [#allocation2], %s255
        %p257 = pneg %p49
        %p258 = pneg %p46
        %s259 = sand.u32 %s28, 1
        %s260 = scalar_lea.sflag [#allocation6], %s259
        %s261 = sand.u32 %s62, 1
        %s262 = smul.addr %s261, 8
        %s263 = scalar_lea.vmem [#allocation5], %s262
        %p264 = pneg %p75
        %p265 = pneg %p72
        %p266 = pneg %p96
        %p267 = pneg %p93
        %p268 = pneg %p122
        %p269 = pneg %p119
        %s270 = sand.u32 %s109, 1
        %s271 = scalar_lea.sflag [#allocation4], %s270
        %s272 = sand.u32 %s109, 1
        %s273 = smul.addr %s272, 16
        %s274 = scalar_lea.vmem [#allocation8], %s273
        %p275 = pneg %p148
        %p276 = pneg %p145
        %s277 = sand.u32 %s135, 1
        %s278 = scalar_lea.sflag [#allocation10], %s277
        %s279 = sand.u32 %s135, 1
        %s280 = smul.addr %s279, 8
        %s281 = scalar_lea.vmem [#allocation9], %s280
        %s282 = smul.u32 8, %s28
        %s283 = smul.u32 8, %s28
        %s284 = smul.u32 8, %s28
        %s285 = smul.u32 8, %s28
        %v286 = vld [vmem:[%s231] sm:$0xff]
        %v287 = vld [vmem:[%s231 + $0x8] sm:$0xff]
        %v288 = vld [vmem:[%s241] sm:$0xff]
        %v289 = vld [vmem:[#allocation7] sm:$0xff]
        %v290 = vld [vmem:[#allocation7 + $0x8] sm:$0xff]
        %292 = vset.pattern.permute.xlu0 10
        %293 = vperm.xlu0 %292, %v289
        %v294 = vpop.permute.xlu0 %293
        %297 = vset.pattern.permute.xlu0 10
        %298 = vperm.xlu0 %297, %v290
        %v299 = vpop.permute.xlu0 %298
        %v303 = vperm.slane %v286, 1
        %v304 = vperm.slane %v286, 3
        %v305 = vperm.slane %v286, 5
        %v306 = vperm.slane %v286, 7
        %v307 = vperm.slane %v287, 1
        %v308 = vperm.slane %v287, 3
        %v309 = vperm.slane %v287, 5
        %v310 = vperm.slane %v287, 7
        %v319 = vperm.slane %v303, 1
        %v320 = vperm.slane %v304, 1
        %v321 = vperm.slane %v305, 1
        %v322 = vperm.slane %v306, 1
        %v323 = vperm.slane %v307, 1
        %v324 = vperm.slane %v308, 1
        %v325 = vperm.slane %v309, 1
        %v326 = vperm.slane %v310, 1
        %v327 = vmul.f32 %v294, %v319
        %v328 = vmul.f32 %v294, %v320
        %v329 = vmul.f32 %v294, %v321
        %v330 = vmul.f32 %v294, %v322
        %v331 = vmul.f32 %v294, %v323
        %v332 = vmul.f32 %v294, %v324
        %v333 = vmul.f32 %v294, %v325
        %v334 = vmul.f32 %v294, %v326
        %v335 = vmul.f32 %v299, %v319
        %v336 = vmul.f32 %v299, %v320
        %v337 = vmul.f32 %v299, %v321
        %v338 = vmul.f32 %v299, %v322
        %v339 = vmul.f32 %v299, %v323
        %v340 = vmul.f32 %v299, %v324
        %v341 = vmul.f32 %v299, %v325
        %v342 = vmul.f32 %v299, %v326
        %343 = vset.pattern.permute.xlu0 11
        %344 = vperm.xlu0 %343, %v289
        %v345 = vpop.permute.xlu0 %344
        %347 = vset.pattern.permute.xlu0 11
        %348 = vperm.xlu0 %347, %v290
        %v349 = vpop.permute.xlu0 %348
        %v351 = vadd.f32 %v327, %v345
        %v352 = vadd.f32 %v328, %v345
        %v353 = vadd.f32 %v329, %v345
        %v354 = vadd.f32 %v330, %v345
        %v355 = vadd.f32 %v331, %v345
        %v356 = vadd.f32 %v332, %v345
        %v357 = vadd.f32 %v333, %v345
        %v358 = vadd.f32 %v334, %v345
        %v359 = vadd.f32 %v335, %v349
        %v360 = vadd.f32 %v336, %v349
        %v361 = vadd.f32 %v337, %v349
        %v362 = vadd.f32 %v338, %v349
        %v363 = vadd.f32 %v339, %v349
        %v364 = vadd.f32 %v340, %v349
        %v365 = vadd.f32 %v341, %v349
        %v366 = vadd.f32 %v342, %v349
        %v367 = vmax.f32 %v351, 0.0
        %v368 = vmax.f32 %v352, 0.0
        %v369 = vmax.f32 %v353, 0.0
        %v370 = vmax.f32 %v354, 0.0
        %v371 = vmax.f32 %v355, 0.0
        %v372 = vmax.f32 %v356, 0.0
        %v373 = vmax.f32 %v357, 0.0
        %v374 = vmax.f32 %v358, 0.0
        %v375 = vmax.f32 %v359, 0.0
        %v376 = vmax.f32 %v360, 0.0
        %v377 = vmax.f32 %v361, 0.0
        %v378 = vmax.f32 %v362, 0.0
        %v379 = vmax.f32 %v363, 0.0
        %v380 = vmax.f32 %v364, 0.0
        %v381 = vmax.f32 %v365, 0.0
        %v382 = vmax.f32 %v366, 0.0
        %383 = vset.pattern.permute.xlu0 12
        %384 = vperm.xlu0 %383, %v289
        %v385 = vpop.permute.xlu0 %384
        %387 = vset.pattern.permute.xlu0 12
        %388 = vperm.xlu0 %387, %v290
        %v389 = vpop.permute.xlu0 %388
        %vm391 = vcmask 80896
        %v392 = vsel %vm391, %v289, 0
        %v394 = vsel %vm391, %v290, 0
        %vm396 = vcmask 1041408
        %v398 = vsel %vm396, %v375, 0
        %v401 = vsel %vm396, %v376, 0
        %v404 = vsel %vm396, %v377, 0
        %v407 = vsel %vm396, %v378, 0
        %v410 = vsel %vm396, %v379, 0
        %v413 = vsel %vm396, %v380, 0
        %v416 = vsel %vm396, %v381, 0
        %v419 = vsel %vm396, %v382, 0
        %421 = vmatpush.msra.mxu0 0.0
        %422 = vmatpush.msra.mxu0 0.0
        %423 = vmatpush.msra.mxu0 0.0
        %424 = vmatpush.msra.mxu0 0.0
        %425 = vmatpush.msra.mxu0 0.0
        %426 = vmatpush.msra.mxu0 0.0
        %427 = vmatpush.msra.mxu0 0.0
        %428 = vmatpush.msra.mxu0 0.0
        %429 = vmatpush.msra.mxu0 0.0
        %430 = vmatpush.msra.mxu0 0.0
        %431 = vmatpush.msra.mxu0 0.0
        %432 = vmatpush.msra.mxu0 0.0
        %433 = vmatpush.msra.mxu0 0.0
        %434 = vmatpush.msra.mxu0 0.0
        %435 = vmatpush.msra.mxu0 %v398
        %436 = vmatpush.msra.mxu0 %v367
        %437 = vmatmul.f32.gmra.mxu0 %v392
        %v438 = vpop.f32.mrf.mxu0
        %v439 = vadd.f32 %v385, %v438
        %440 = vmatmul.f32.gmra.mxu0 %v394
        %v441 = vpop.f32.mrf.mxu0
        %v442 = vadd.f32 %v389, %v441
        %443 = vdwg.mxu0
        %444 = vmatpush.msra.mxu0 0.0
        %445 = vmatpush.msra.mxu0 0.0
        %446 = vmatpush.msra.mxu0 0.0
        %447 = vmatpush.msra.mxu0 0.0
        %448 = vmatpush.msra.mxu0 0.0
        %449 = vmatpush.msra.mxu0 0.0
        %450 = vmatpush.msra.mxu0 0.0
        %451 = vmatpush.msra.mxu0 0.0
        %452 = vmatpush.msra.mxu0 0.0
        %453 = vmatpush.msra.mxu0 0.0
        %454 = vmatpush.msra.mxu0 0.0
        %455 = vmatpush.msra.mxu0 0.0
        %456 = vmatpush.msra.mxu0 0.0
        %457 = vmatpush.msra.mxu0 0.0
        %458 = vmatpush.msra.mxu0 %v401
        %459 = vmatpush.msra.mxu0 %v368
        %460 = vmatmul.f32.gmra.mxu0 %v392
        %v461 = vpop.f32.mrf.mxu0
        %v462 = vadd.f32 %v385, %v461
        %463 = vmatmul.f32.gmra.mxu0 %v394
        %v464 = vpop.f32.mrf.mxu0
        %v465 = vadd.f32 %v389, %v464
        %466 = vdwg.mxu0
        %467 = vmatpush.msra.mxu0 0.0
        %468 = vmatpush.msra.mxu0 0.0
        %469 = vmatpush.msra.mxu0 0.0
        %470 = vmatpush.msra.mxu0 0.0
        %471 = vmatpush.msra.mxu0 0.0
        %472 = vmatpush.msra.mxu0 0.0
        %473 = vmatpush.msra.mxu0 0.0
        %474 = vmatpush.msra.mxu0 0.0
        %475 = vmatpush.msra.mxu0 0.0
        %476 = vmatpush.msra.mxu0 0.0
        %477 = vmatpush.msra.mxu0 0.0
        %478 = vmatpush.msra.mxu0 0.0
        %479 = vmatpush.msra.mxu0 0.0
        %480 = vmatpush.msra.mxu0 0.0
        %481 = vmatpush.msra.mxu0 %v404
        %482 = vmatpush.msra.mxu0 %v369
        %483 = vmatmul.f32.gmra.mxu0 %v392
        %v484 = vpop.f32.mrf.mxu0
        %v485 = vadd.f32 %v385, %v484
        %486 = vmatmul.f32.gmra.mxu0 %v394
        %v487 = vpop.f32.mrf.mxu0
        %v488 = vadd.f32 %v389, %v487
        %489 = vdwg.mxu0
        %490 = vmatpush.msra.mxu0 0.0
        %491 = vmatpush.msra.mxu0 0.0
        %492 = vmatpush.msra.mxu0 0.0
        %493 = vmatpush.msra.mxu0 0.0
        %494 = vmatpush.msra.mxu0 0.0
        %495 = vmatpush.msra.mxu0 0.0
        %496 = vmatpush.msra.mxu0 0.0
        %497 = vmatpush.msra.mxu0 0.0
        %498 = vmatpush.msra.mxu0 0.0
        %499 = vmatpush.msra.mxu0 0.0
        %500 = vmatpush.msra.mxu0 0.0
        %501 = vmatpush.msra.mxu0 0.0
        %502 = vmatpush.msra.mxu0 0.0
        %503 = vmatpush.msra.mxu0 0.0
        %504 = vmatpush.msra.mxu0 %v407
        %505 = vmatpush.msra.mxu0 %v370
        %506 = vmatmul.f32.gmra.mxu0 %v392
        %v507 = vpop.f32.mrf.mxu0
        %v508 = vadd.f32 %v385, %v507
        %509 = vmatmul.f32.gmra.mxu0 %v394
        %v510 = vpop.f32.mrf.mxu0
        %v511 = vadd.f32 %v389, %v510
        %512 = vdwg.mxu0
        %513 = vmatpush.msra.mxu0 0.0
        %514 = vmatpush.msra.mxu0 0.0
        %515 = vmatpush.msra.mxu0 0.0
        %516 = vmatpush.msra.mxu0 0.0
        %517 = vmatpush.msra.mxu0 0.0
        %518 = vmatpush.msra.mxu0 0.0
        %519 = vmatpush.msra.mxu0 0.0
        %520 = vmatpush.msra.mxu0 0.0
        %521 = vmatpush.msra.mxu0 0.0
        %522 = vmatpush.msra.mxu0 0.0
        %523 = vmatpush.msra.mxu0 0.0
        %524 = vmatpush.msra.mxu0 0.0
        %525 = vmatpush.msra.mxu0 0.0
        %526 = vmatpush.msra.mxu0 0.0
        %527 = vmatpush.msra.mxu0 %v410
        %528 = vmatpush.msra.mxu0 %v371
        %529 = vmatmul.f32.gmra.mxu0 %v392
        %v530 = vpop.f32.mrf.mxu0
        %v531 = vadd.f32 %v385, %v530
        %532 = vmatmul.f32.gmra.mxu0 %v394
        %v533 = vpop.f32.mrf.mxu0
        %v534 = vadd.f32 %v389, %v533
        %535 = vdwg.mxu0
        %536 = vmatpush.msra.mxu0 0.0
        %537 = vmatpush.msra.mxu0 0.0
        %538 = vmatpush.msra.mxu0 0.0
        %539 = vmatpush.msra.mxu0 0.0
        %540 = vmatpush.msra.mxu0 0.0
        %541 = vmatpush.msra.mxu0 0.0
        %542 = vmatpush.msra.mxu0 0.0
        %543 = vmatpush.msra.mxu0 0.0
        %544 = vmatpush.msra.mxu0 0.0
        %545 = vmatpush.msra.mxu0 0.0
        %546 = vmatpush.msra.mxu0 0.0
        %547 = vmatpush.msra.mxu0 0.0
        %548 = vmatpush.msra.mxu0 0.0
        %549 = vmatpush.msra.mxu0 0.0
        %550 = vmatpush.msra.mxu0 %v413
        %551 = vmatpush.msra.mxu0 %v372
        %552 = vmatmul.f32.gmra.mxu0 %v392
        %v553 = vpop.f32.mrf.mxu0
        %v554 = vadd.f32 %v385, %v553
        %555 = vmatmul.f32.gmra.mxu0 %v394
        %v556 = vpop.f32.mrf.mxu0
        %v557 = vadd.f32 %v389, %v556
        %558 = vdwg.mxu0
        %559 = vmatpush.msra.mxu0 0.0
        %560 = vmatpush.msra.mxu0 0.0
        %561 = vmatpush.msra.mxu0 0.0
        %562 = vmatpush.msra.mxu0 0.0
        %563 = vmatpush.msra.mxu0 0.0
        %564 = vmatpush.msra.mxu0 0.0
        %565 = vmatpush.msra.mxu0 0.0
        %566 = vmatpush.msra.mxu0 0.0
        %567 = vmatpush.msra.mxu0 0.0
        %568 = vmatpush.msra.mxu0 0.0
        %569 = vmatpush.msra.mxu0 0.0
        %570 = vmatpush.msra.mxu0 0.0
        %571 = vmatpush.msra.mxu0 0.0
        %572 = vmatpush.msra.mxu0 0.0
        %573 = vmatpush.msra.mxu0 %v416
        %574 = vmatpush.msra.mxu0 %v373
        %575 = vmatmul.f32.gmra.mxu0 %v392
        %v576 = vpop.f32.mrf.mxu0
        %v577 = vadd.f32 %v385, %v576
        %578 = vmatmul.f32.gmra.mxu0 %v394
        %v579 = vpop.f32.mrf.mxu0
        %v580 = vadd.f32 %v389, %v579
        %581 = vdwg.mxu0
        %582 = vmatpush.msra.mxu0 0.0
        %583 = vmatpush.msra.mxu0 0.0
        %584 = vmatpush.msra.mxu0 0.0
        %585 = vmatpush.msra.mxu0 0.0
        %586 = vmatpush.msra.mxu0 0.0
        %587 = vmatpush.msra.mxu0 0.0
        %588 = vmatpush.msra.mxu0 0.0
        %589 = vmatpush.msra.mxu0 0.0
        %590 = vmatpush.msra.mxu0 0.0
        %591 = vmatpush.msra.mxu0 0.0
        %592 = vmatpush.msra.mxu0 0.0
        %593 = vmatpush.msra.mxu0 0.0
        %594 = vmatpush.msra.mxu0 0.0
        %595 = vmatpush.msra.mxu0 0.0
        %596 = vmatpush.msra.mxu0 %v419
        %597 = vmatpush.msra.mxu0 %v374
        %598 = vmatmul.f32.gmra.mxu0 %v392
        %v599 = vpop.f32.mrf.mxu0
        %v600 = vadd.f32 %v385, %v599
        %601 = vmatmul.f32.gmra.mxu0 %v394
        %v602 = vpop.f32.mrf.mxu0
        %v603 = vadd.f32 %v389, %v602
        %604 = vdwg.mxu0
        %v605 = vmax.f32 %v439, 0.0
        %v606 = vmax.f32 %v462, 0.0
        %v607 = vmax.f32 %v485, 0.0
        %v608 = vmax.f32 %v508, 0.0
        %v609 = vmax.f32 %v531, 0.0
        %v610 = vmax.f32 %v554, 0.0
        %v611 = vmax.f32 %v577, 0.0
        %v612 = vmax.f32 %v600, 0.0
        %v613 = vmax.f32 %v442, 0.0
        %v614 = vmax.f32 %v465, 0.0
        %v615 = vmax.f32 %v488, 0.0
        %v616 = vmax.f32 %v511, 0.0
        %v617 = vmax.f32 %v534, 0.0
        %v618 = vmax.f32 %v557, 0.0
        %v619 = vmax.f32 %v580, 0.0
        %v620 = vmax.f32 %v603, 0.0
        %621 = vset.pattern.permute.xlu0 13
        %622 = vperm.xlu0 %621, %v289
        %v623 = vpop.permute.xlu0 %622
        %625 = vset.pattern.permute.xlu0 13
        %626 = vperm.xlu0 %625, %v290
        %v627 = vpop.permute.xlu0 %626
        %v629 = vmul.f32 %v623, %v605
        %v630 = vmul.f32 %v623, %v606
        %v631 = vmul.f32 %v623, %v607
        %v632 = vmul.f32 %v623, %v608
        %v633 = vmul.f32 %v623, %v609
        %v634 = vmul.f32 %v623, %v610
        %v635 = vmul.f32 %v623, %v611
        %v636 = vmul.f32 %v623, %v612
        %v637 = vmul.f32 %v627, %v613
        %v638 = vmul.f32 %v627, %v614
        %v639 = vmul.f32 %v627, %v615
        %v640 = vmul.f32 %v627, %v616
        %v641 = vmul.f32 %v627, %v617
        %v642 = vmul.f32 %v627, %v618
        %v643 = vmul.f32 %v627, %v619
        %v644 = vmul.f32 %v627, %v620
        %v645 = vsel %vm396, %v637, 0.0
        %v646 = vadd.f32 %v629, %v645
        %v647 = vrot.slane %v646, 4
        %v648 = vadd.f32 %v646, %v647
        %v649 = vrot.slane %v648, 2
        %v650 = vadd.f32 %v648, %v649
        %v651 = vrot.slane %v650, 1
        %v652 = vadd.f32 %v650, %v651
        %v653 = vsel %vm396, %v638, 0.0
        %v654 = vadd.f32 %v630, %v653
        %v655 = vrot.slane %v654, 4
        %v656 = vadd.f32 %v654, %v655
        %v657 = vrot.slane %v656, 2
        %v658 = vadd.f32 %v656, %v657
        %v659 = vrot.slane %v658, 1
        %v660 = vadd.f32 %v658, %v659
        %v661 = vsel %vm396, %v639, 0.0
        %v662 = vadd.f32 %v631, %v661
        %v663 = vrot.slane %v662, 4
        %v664 = vadd.f32 %v662, %v663
        %v665 = vrot.slane %v664, 2
        %v666 = vadd.f32 %v664, %v665
        %v667 = vrot.slane %v666, 1
        %v668 = vadd.f32 %v666, %v667
        %v669 = vsel %vm396, %v640, 0.0
        %v670 = vadd.f32 %v632, %v669
        %v671 = vrot.slane %v670, 4
        %v672 = vadd.f32 %v670, %v671
        %v673 = vrot.slane %v672, 2
        %v674 = vadd.f32 %v672, %v673
        %v675 = vrot.slane %v674, 1
        %v676 = vadd.f32 %v674, %v675
        %v677 = vsel %vm396, %v641, 0.0
        %v678 = vadd.f32 %v633, %v677
        %v679 = vrot.slane %v678, 4
        %v680 = vadd.f32 %v678, %v679
        %v681 = vrot.slane %v680, 2
        %v682 = vadd.f32 %v680, %v681
        %v683 = vrot.slane %v682, 1
        %v684 = vadd.f32 %v682, %v683
        %v685 = vsel %vm396, %v642, 0.0
        %v686 = vadd.f32 %v634, %v685
        %v687 = vrot.slane %v686, 4
        %v688 = vadd.f32 %v686, %v687
        %v689 = vrot.slane %v688, 2
        %v690 = vadd.f32 %v688, %v689
        %v691 = vrot.slane %v690, 1
        %v692 = vadd.f32 %v690, %v691
        %v693 = vsel %vm396, %v643, 0.0
        %v694 = vadd.f32 %v635, %v693
        %v695 = vrot.slane %v694, 4
        %v696 = vadd.f32 %v694, %v695
        %v697 = vrot.slane %v696, 2
        %v698 = vadd.f32 %v696, %v697
        %v699 = vrot.slane %v698, 1
        %v700 = vadd.f32 %v698, %v699
        %v701 = vsel %vm396, %v644, 0.0
        %v702 = vadd.f32 %v636, %v701
        %v703 = vrot.slane %v702, 4
        %v704 = vadd.f32 %v702, %v703
        %v705 = vrot.slane %v704, 2
        %v706 = vadd.f32 %v704, %v705
        %v707 = vrot.slane %v706, 1
        %v708 = vadd.f32 %v706, %v707
        %709 = vset.pattern.permute.xlu0 14
        %710 = vperm.xlu0 %709, %v289
        %v711 = vpop.permute.xlu0 %710
        %v713 = vadd.f32 %v652, %v711
        %v714 = vadd.f32 %v660, %v711
        %v715 = vadd.f32 %v668, %v711
        %v716 = vadd.f32 %v676, %v711
        %v717 = vadd.f32 %v684, %v711
        %v718 = vadd.f32 %v692, %v711
        %v719 = vadd.f32 %v700, %v711
        %v720 = vadd.f32 %v708, %v711
        %v729 = vrot.slane %v714, 6
        %v730 = vrot.slane %v715, 4
        %v731 = vrot.slane %v716, 2
        %v732 = vrot.slane %v718, 6
        %v733 = vrot.slane %v719, 4
        %v734 = vrot.slane %v720, 2
        %v735 = vsel %vm396, %v713, %v729
        %vm736 = vcmask 1045508
        %v737 = vsel %vm736, %v730, %v731
        %vm738 = vcmask 1043456
        %v739 = vsel %vm738, %v735, %v737
        %v740 = vsel %vm396, %v717, %v732
        %v741 = vsel %vm736, %v733, %v734
        %v742 = vsel %vm738, %v740, %v741
        %v745 = vadd.f32 %v286, %v739
        %v746 = vadd.f32 %v287, %v742
        %747 = vset.pattern.permute.xlu0 74
        %748 = vperm.xlu0 %747, %v289
        %v749 = vpop.permute.xlu0 %748
        %751 = vset.pattern.permute.xlu0 74
        %752 = vperm.xlu0 %751, %v290
        %v753 = vpop.permute.xlu0 %752
        %v757 = vperm.slane %v745, 0
        %v758 = vperm.slane %v745, 2
        %v759 = vperm.slane %v745, 4
        %v760 = vperm.slane %v745, 6
        %v761 = vperm.slane %v746, 0
        %v762 = vperm.slane %v746, 2
        %v763 = vperm.slane %v746, 4
        %v764 = vperm.slane %v746, 6
        %v773 = vperm.slane %v757, 0
        %v774 = vperm.slane %v758, 0
        %v775 = vperm.slane %v759, 0
        %v776 = vperm.slane %v760, 0
        %v777 = vperm.slane %v761, 0
        %v778 = vperm.slane %v762, 0
        %v779 = vperm.slane %v763, 0
        %v780 = vperm.slane %v764, 0
        %v781 = vmul.f32 %v749, %v773
        %v782 = vmul.f32 %v749, %v774
        %v783 = vmul.f32 %v749, %v775
        %v784 = vmul.f32 %v749, %v776
        %v785 = vmul.f32 %v749, %v777
        %v786 = vmul.f32 %v749, %v778
        %v787 = vmul.f32 %v749, %v779
        %v788 = vmul.f32 %v749, %v780
        %v789 = vmul.f32 %v753, %v773
        %v790 = vmul.f32 %v753, %v774
        %v791 = vmul.f32 %v753, %v775
        %v792 = vmul.f32 %v753, %v776
        %v793 = vmul.f32 %v753, %v777
        %v794 = vmul.f32 %v753, %v778
        %v795 = vmul.f32 %v753, %v779
        %v796 = vmul.f32 %v753, %v780
        %797 = vset.pattern.permute.xlu0 75
        %798 = vperm.xlu0 %797, %v289
        %v799 = vpop.permute.xlu0 %798
        %801 = vset.pattern.permute.xlu0 75
        %802 = vperm.xlu0 %801, %v290
        %v803 = vpop.permute.xlu0 %802
        %v805 = vadd.f32 %v781, %v799
        %v806 = vadd.f32 %v782, %v799
        %v807 = vadd.f32 %v783, %v799
        %v808 = vadd.f32 %v784, %v799
        %v809 = vadd.f32 %v785, %v799
        %v810 = vadd.f32 %v786, %v799
        %v811 = vadd.f32 %v787, %v799
        %v812 = vadd.f32 %v788, %v799
        %v813 = vadd.f32 %v789, %v803
        %v814 = vadd.f32 %v790, %v803
        %v815 = vadd.f32 %v791, %v803
        %v816 = vadd.f32 %v792, %v803
        %v817 = vadd.f32 %v793, %v803
        %v818 = vadd.f32 %v794, %v803
        %v819 = vadd.f32 %v795, %v803
        %v820 = vadd.f32 %v796, %v803
        %v821 = vmax.f32 %v805, 0.0
        %v822 = vmax.f32 %v806, 0.0
        %v823 = vmax.f32 %v807, 0.0
        %v824 = vmax.f32 %v808, 0.0
        %v825 = vmax.f32 %v809, 0.0
        %v826 = vmax.f32 %v810, 0.0
        %v827 = vmax.f32 %v811, 0.0
        %v828 = vmax.f32 %v812, 0.0
        %v829 = vmax.f32 %v813, 0.0
        %v830 = vmax.f32 %v814, 0.0
        %v831 = vmax.f32 %v815, 0.0
        %v832 = vmax.f32 %v816, 0.0
        %v833 = vmax.f32 %v817, 0.0
        %v834 = vmax.f32 %v818, 0.0
        %v835 = vmax.f32 %v819, 0.0
        %v836 = vmax.f32 %v820, 0.0
        %837 = vset.pattern.permute.xlu0 76
        %838 = vperm.xlu0 %837, %v289
        %v839 = vpop.permute.xlu0 %838
        %841 = vset.pattern.permute.xlu0 76
        %842 = vperm.xlu0 %841, %v290
        %v843 = vpop.permute.xlu0 %842
        %845 = vrot.lane.b32.xlu0 %v289, 64
        %v846 = vpop.permute.xlu0 %845
        %847 = vrot.lane.b32.xlu0 %v290, 64
        %v848 = vpop.permute.xlu0 %847
        %v849 = vsel %vm391, %v846, 0
        %v851 = vsel %vm391, %v848, 0
        %v854 = vsel %vm396, %v829, 0
        %v857 = vsel %vm396, %v830, 0
        %v860 = vsel %vm396, %v831, 0
        %v863 = vsel %vm396, %v832, 0
        %v866 = vsel %vm396, %v833, 0
        %v869 = vsel %vm396, %v834, 0
        %v872 = vsel %vm396, %v835, 0
        %v875 = vsel %vm396, %v836, 0
        %877 = vmatpush.msra.mxu0 0.0
        %878 = vmatpush.msra.mxu0 0.0
        %879 = vmatpush.msra.mxu0 0.0
        %880 = vmatpush.msra.mxu0 0.0
        %881 = vmatpush.msra.mxu0 0.0
        %882 = vmatpush.msra.mxu0 0.0
        %883 = vmatpush.msra.mxu0 0.0
        %884 = vmatpush.msra.mxu0 0.0
        %885 = vmatpush.msra.mxu0 0.0
        %886 = vmatpush.msra.mxu0 0.0
        %887 = vmatpush.msra.mxu0 0.0
        %888 = vmatpush.msra.mxu0 0.0
        %889 = vmatpush.msra.mxu0 0.0
        %890 = vmatpush.msra.mxu0 0.0
        %891 = vmatpush.msra.mxu0 %v854
        %892 = vmatpush.msra.mxu0 %v821
        %893 = vmatmul.f32.gmra.mxu0 %v849
        %v894 = vpop.f32.mrf.mxu0
        %v895 = vadd.f32 %v839, %v894
        %896 = vmatmul.f32.gmra.mxu0 %v851
        %v897 = vpop.f32.mrf.mxu0
        %v898 = vadd.f32 %v843, %v897
        %899 = vdwg.mxu0
        %900 = vmatpush.msra.mxu0 0.0
        %901 = vmatpush.msra.mxu0 0.0
        %902 = vmatpush.msra.mxu0 0.0
        %903 = vmatpush.msra.mxu0 0.0
        %904 = vmatpush.msra.mxu0 0.0
        %905 = vmatpush.msra.mxu0 0.0
        %906 = vmatpush.msra.mxu0 0.0
        %907 = vmatpush.msra.mxu0 0.0
        %908 = vmatpush.msra.mxu0 0.0
        %909 = vmatpush.msra.mxu0 0.0
        %910 = vmatpush.msra.mxu0 0.0
        %911 = vmatpush.msra.mxu0 0.0
        %912 = vmatpush.msra.mxu0 0.0
        %913 = vmatpush.msra.mxu0 0.0
        %914 = vmatpush.msra.mxu0 %v857
        %915 = vmatpush.msra.mxu0 %v822
        %916 = vmatmul.f32.gmra.mxu0 %v849
        %v917 = vpop.f32.mrf.mxu0
        %v918 = vadd.f32 %v839, %v917
        %919 = vmatmul.f32.gmra.mxu0 %v851
        %v920 = vpop.f32.mrf.mxu0
        %v921 = vadd.f32 %v843, %v920
        %922 = vdwg.mxu0
        %923 = vmatpush.msra.mxu0 0.0
        %924 = vmatpush.msra.mxu0 0.0
        %925 = vmatpush.msra.mxu0 0.0
        %926 = vmatpush.msra.mxu0 0.0
        %927 = vmatpush.msra.mxu0 0.0
        %928 = vmatpush.msra.mxu0 0.0
        %929 = vmatpush.msra.mxu0 0.0
        %930 = vmatpush.msra.mxu0 0.0
        %931 = vmatpush.msra.mxu0 0.0
        %932 = vmatpush.msra.mxu0 0.0
        %933 = vmatpush.msra.mxu0 0.0
        %934 = vmatpush.msra.mxu0 0.0
        %935 = vmatpush.msra.mxu0 0.0
        %936 = vmatpush.msra.mxu0 0.0
        %937 = vmatpush.msra.mxu0 %v860
        %938 = vmatpush.msra.mxu0 %v823
        %939 = vmatmul.f32.gmra.mxu0 %v849
        %v940 = vpop.f32.mrf.mxu0
        %v941 = vadd.f32 %v839, %v940
        %942 = vmatmul.f32.gmra.mxu0 %v851
        %v943 = vpop.f32.mrf.mxu0
        %v944 = vadd.f32 %v843, %v943
        %945 = vdwg.mxu0
        %946 = vmatpush.msra.mxu0 0.0
        %947 = vmatpush.msra.mxu0 0.0
        %948 = vmatpush.msra.mxu0 0.0
        %949 = vmatpush.msra.mxu0 0.0
        %950 = vmatpush.msra.mxu0 0.0
        %951 = vmatpush.msra.mxu0 0.0
        %952 = vmatpush.msra.mxu0 0.0
        %953 = vmatpush.msra.mxu0 0.0
        %954 = vmatpush.msra.mxu0 0.0
        %955 = vmatpush.msra.mxu0 0.0
        %956 = vmatpush.msra.mxu0 0.0
        %957 = vmatpush.msra.mxu0 0.0
        %958 = vmatpush.msra.mxu0 0.0
        %959 = vmatpush.msra.mxu0 0.0
        %960 = vmatpush.msra.mxu0 %v863
        %961 = vmatpush.msra.mxu0 %v824
        %962 = vmatmul.f32.gmra.mxu0 %v849
        %v963 = vpop.f32.mrf.mxu0
        %v964 = vadd.f32 %v839, %v963
        %965 = vmatmul.f32.gmra.mxu0 %v851
        %v966 = vpop.f32.mrf.mxu0
        %v967 = vadd.f32 %v843, %v966
        %968 = vdwg.mxu0
        %969 = vmatpush.msra.mxu0 0.0
        %970 = vmatpush.msra.mxu0 0.0
        %971 = vmatpush.msra.mxu0 0.0
        %972 = vmatpush.msra.mxu0 0.0
        %973 = vmatpush.msra.mxu0 0.0
        %974 = vmatpush.msra.mxu0 0.0
        %975 = vmatpush.msra.mxu0 0.0
        %976 = vmatpush.msra.mxu0 0.0
        %977 = vmatpush.msra.mxu0 0.0
        %978 = vmatpush.msra.mxu0 0.0
        %979 = vmatpush.msra.mxu0 0.0
        %980 = vmatpush.msra.mxu0 0.0
        %981 = vmatpush.msra.mxu0 0.0
        %982 = vmatpush.msra.mxu0 0.0
        %983 = vmatpush.msra.mxu0 %v866
        %984 = vmatpush.msra.mxu0 %v825
        %985 = vmatmul.f32.gmra.mxu0 %v849
        %v986 = vpop.f32.mrf.mxu0
        %v987 = vadd.f32 %v839, %v986
        %988 = vmatmul.f32.gmra.mxu0 %v851
        %v989 = vpop.f32.mrf.mxu0
        %v990 = vadd.f32 %v843, %v989
        %991 = vdwg.mxu0
        %992 = vmatpush.msra.mxu0 0.0
        %993 = vmatpush.msra.mxu0 0.0
        %994 = vmatpush.msra.mxu0 0.0
        %995 = vmatpush.msra.mxu0 0.0
        %996 = vmatpush.msra.mxu0 0.0
        %997 = vmatpush.msra.mxu0 0.0
        %998 = vmatpush.msra.mxu0 0.0
        %999 = vmatpush.msra.mxu0 0.0
        %1000 = vmatpush.msra.mxu0 0.0
        %1001 = vmatpush.msra.mxu0 0.0
        %1002 = vmatpush.msra.mxu0 0.0
        %1003 = vmatpush.msra.mxu0 0.0
        %1004 = vmatpush.msra.mxu0 0.0
        %1005 = vmatpush.msra.mxu0 0.0
        %1006 = vmatpush.msra.mxu0 %v869
        %1007 = vmatpush.msra.mxu0 %v826
        %1008 = vmatmul.f32.gmra.mxu0 %v849
        %v1009 = vpop.f32.mrf.mxu0
        %v1010 = vadd.f32 %v839, %v1009
        %1011 = vmatmul.f32.gmra.mxu0 %v851
        %v1012 = vpop.f32.mrf.mxu0
        %v1013 = vadd.f32 %v843, %v1012
        %1014 = vdwg.mxu0
        %1015 = vmatpush.msra.mxu0 0.0
        %1016 = vmatpush.msra.mxu0 0.0
        %1017 = vmatpush.msra.mxu0 0.0
        %1018 = vmatpush.msra.mxu0 0.0
        %1019 = vmatpush.msra.mxu0 0.0
        %1020 = vmatpush.msra.mxu0 0.0
        %1021 = vmatpush.msra.mxu0 0.0
        %1022 = vmatpush.msra.mxu0 0.0
        %1023 = vmatpush.msra.mxu0 0.0
        %1024 = vmatpush.msra.mxu0 0.0
        %1025 = vmatpush.msra.mxu0 0.0
        %1026 = vmatpush.msra.mxu0 0.0
        %1027 = vmatpush.msra.mxu0 0.0
        %1028 = vmatpush.msra.mxu0 0.0
        %1029 = vmatpush.msra.mxu0 %v872
        %1030 = vmatpush.msra.mxu0 %v827
        %1031 = vmatmul.f32.gmra.mxu0 %v849
        %v1032 = vpop.f32.mrf.mxu0
        %v1033 = vadd.f32 %v839, %v1032
        %1034 = vmatmul.f32.gmra.mxu0 %v851
        %v1035 = vpop.f32.mrf.mxu0
        %v1036 = vadd.f32 %v843, %v1035
        %1037 = vdwg.mxu0
        %1038 = vmatpush.msra.mxu0 0.0
        %1039 = vmatpush.msra.mxu0 0.0
        %1040 = vmatpush.msra.mxu0 0.0
        %1041 = vmatpush.msra.mxu0 0.0
        %1042 = vmatpush.msra.mxu0 0.0
        %1043 = vmatpush.msra.mxu0 0.0
        %1044 = vmatpush.msra.mxu0 0.0
        %1045 = vmatpush.msra.mxu0 0.0
        %1046 = vmatpush.msra.mxu0 0.0
        %1047 = vmatpush.msra.mxu0 0.0
        %1048 = vmatpush.msra.mxu0 0.0
        %1049 = vmatpush.msra.mxu0 0.0
        %1050 = vmatpush.msra.mxu0 0.0
        %1051 = vmatpush.msra.mxu0 0.0
        %1052 = vmatpush.msra.mxu0 %v875
        %1053 = vmatpush.msra.mxu0 %v828
        %1054 = vmatmul.f32.gmra.mxu0 %v849
        %v1055 = vpop.f32.mrf.mxu0
        %v1056 = vadd.f32 %v839, %v1055
        %1057 = vmatmul.f32.gmra.mxu0 %v851
        %v1058 = vpop.f32.mrf.mxu0
        %v1059 = vadd.f32 %v843, %v1058
        %1060 = vdwg.mxu0
        %v1061 = vmax.f32 %v895, 0.0
        %v1062 = vmax.f32 %v918, 0.0
        %v1063 = vmax.f32 %v941, 0.0
        %v1064 = vmax.f32 %v964, 0.0
        %v1065 = vmax.f32 %v987, 0.0
        %v1066 = vmax.f32 %v1010, 0.0
        %v1067 = vmax.f32 %v1033, 0.0
        %v1068 = vmax.f32 %v1056, 0.0
        %v1069 = vmax.f32 %v898, 0.0
        %v1070 = vmax.f32 %v921, 0.0
        %v1071 = vmax.f32 %v944, 0.0
        %v1072 = vmax.f32 %v967, 0.0
        %v1073 = vmax.f32 %v990, 0.0
        %v1074 = vmax.f32 %v1013, 0.0
        %v1075 = vmax.f32 %v1036, 0.0
        %v1076 = vmax.f32 %v1059, 0.0
        %1077 = vset.pattern.permute.xlu0 77
        %1078 = vperm.xlu0 %1077, %v289
        %v1079 = vpop.permute.xlu0 %1078
        %1081 = vset.pattern.permute.xlu0 77
        %1082 = vperm.xlu0 %1081, %v290
        %v1083 = vpop.permute.xlu0 %1082
        %v1085 = vmul.f32 %v1079, %v1061
        %v1086 = vmul.f32 %v1079, %v1062
        %v1087 = vmul.f32 %v1079, %v1063
        %v1088 = vmul.f32 %v1079, %v1064
        %v1089 = vmul.f32 %v1079, %v1065
        %v1090 = vmul.f32 %v1079, %v1066
        %v1091 = vmul.f32 %v1079, %v1067
        %v1092 = vmul.f32 %v1079, %v1068
        %v1093 = vmul.f32 %v1083, %v1069
        %v1094 = vmul.f32 %v1083, %v1070
        %v1095 = vmul.f32 %v1083, %v1071
        %v1096 = vmul.f32 %v1083, %v1072
        %v1097 = vmul.f32 %v1083, %v1073
        %v1098 = vmul.f32 %v1083, %v1074
        %v1099 = vmul.f32 %v1083, %v1075
        %v1100 = vmul.f32 %v1083, %v1076
        %v1101 = vsel %vm396, %v1093, 0.0
        %v1102 = vadd.f32 %v1085, %v1101
        %v1103 = vrot.slane %v1102, 4
        %v1104 = vadd.f32 %v1102, %v1103
        %v1105 = vrot.slane %v1104, 2
        %v1106 = vadd.f32 %v1104, %v1105
        %v1107 = vrot.slane %v1106, 1
        %v1108 = vadd.f32 %v1106, %v1107
        %v1109 = vsel %vm396, %v1094, 0.0
        %v1110 = vadd.f32 %v1086, %v1109
        %v1111 = vrot.slane %v1110, 4
        %v1112 = vadd.f32 %v1110, %v1111
        %v1113 = vrot.slane %v1112, 2
        %v1114 = vadd.f32 %v1112, %v1113
        %v1115 = vrot.slane %v1114, 1
        %v1116 = vadd.f32 %v1114, %v1115
        %v1117 = vsel %vm396, %v1095, 0.0
        %v1118 = vadd.f32 %v1087, %v1117
        %v1119 = vrot.slane %v1118, 4
        %v1120 = vadd.f32 %v1118, %v1119
        %v1121 = vrot.slane %v1120, 2
        %v1122 = vadd.f32 %v1120, %v1121
        %v1123 = vrot.slane %v1122, 1
        %v1124 = vadd.f32 %v1122, %v1123
        %v1125 = vsel %vm396, %v1096, 0.0
        %v1126 = vadd.f32 %v1088, %v1125
        %v1127 = vrot.slane %v1126, 4
        %v1128 = vadd.f32 %v1126, %v1127
        %v1129 = vrot.slane %v1128, 2
        %v1130 = vadd.f32 %v1128, %v1129
        %v1131 = vrot.slane %v1130, 1
        %v1132 = vadd.f32 %v1130, %v1131
        %v1133 = vsel %vm396, %v1097, 0.0
        %v1134 = vadd.f32 %v1089, %v1133
        %v1135 = vrot.slane %v1134, 4
        %v1136 = vadd.f32 %v1134, %v1135
        %v1137 = vrot.slane %v1136, 2
        %v1138 = vadd.f32 %v1136, %v1137
        %v1139 = vrot.slane %v1138, 1
        %v1140 = vadd.f32 %v1138, %v1139
        %v1141 = vsel %vm396, %v1098, 0.0
        %v1142 = vadd.f32 %v1090, %v1141
        %v1143 = vrot.slane %v1142, 4
        %v1144 = vadd.f32 %v1142, %v1143
        %v1145 = vrot.slane %v1144, 2
        %v1146 = vadd.f32 %v1144, %v1145
        %v1147 = vrot.slane %v1146, 1
        %v1148 = vadd.f32 %v1146, %v1147
        %v1149 = vsel %vm396, %v1099, 0.0
        %v1150 = vadd.f32 %v1091, %v1149
        %v1151 = vrot.slane %v1150, 4
        %v1152 = vadd.f32 %v1150, %v1151
        %v1153 = vrot.slane %v1152, 2
        %v1154 = vadd.f32 %v1152, %v1153
        %v1155 = vrot.slane %v1154, 1
        %v1156 = vadd.f32 %v1154, %v1155
        %v1157 = vsel %vm396, %v1100, 0.0
        %v1158 = vadd.f32 %v1092, %v1157
        %v1159 = vrot.slane %v1158, 4
        %v1160 = vadd.f32 %v1158, %v1159
        %v1161 = vrot.slane %v1160, 2
        %v1162 = vadd.f32 %v1160, %v1161
        %v1163 = vrot.slane %v1162, 1
        %v1164 = vadd.f32 %v1162, %v1163
        %1165 = vset.pattern.permute.xlu0 78
        %1166 = vperm.xlu0 %1165, %v289
        %v1167 = vpop.permute.xlu0 %1166
        %v1169 = vadd.f32 %v1108, %v1167
        %v1170 = vadd.f32 %v1116, %v1167
        %v1171 = vadd.f32 %v1124, %v1167
        %v1172 = vadd.f32 %v1132, %v1167
        %v1173 = vadd.f32 %v1140, %v1167
        %v1174 = vadd.f32 %v1148, %v1167
        %v1175 = vadd.f32 %v1156, %v1167
        %v1176 = vadd.f32 %v1164, %v1167
        %v1185 = vrot.slane %v1170, 6
        %v1186 = vrot.slane %v1171, 4
        %v1187 = vrot.slane %v1172, 2
        %v1188 = vrot.slane %v1174, 6
        %v1189 = vrot.slane %v1175, 4
        %v1190 = vrot.slane %v1176, 2
        %v1191 = vsel %vm396, %v1169, %v1185
        %v1192 = vsel %vm736, %v1186, %v1187
        %v1193 = vsel %vm738, %v1191, %v1192
        %v1194 = vsel %vm396, %v1173, %v1188
        %v1195 = vsel %vm736, %v1189, %v1190
        %v1196 = vsel %vm738, %v1194, %v1195
        %v1197 = vrot.slane %v1193, 7
        %v1198 = vrot.slane %v1196, 7
        %v1201 = vadd.f32 %v286, %v1197
        %v1202 = vadd.f32 %v287, %v1198
        %v1203 = vmul.f32 %v745, %v745
        %v1204 = vmul.f32 %v746, %v746
        %v1205 = vadd.f32 %v1203, 3.675754
        %v1206 = vadd.f32 %v1204, 3.675754
        %v1207 = vmul.f32 %v1201, %v1201
        %v1208 = vmul.f32 %v1202, %v1202
        %v1211 = vrot.slane %v1207, 7
        %v1212 = vrot.slane %v1211, 2
        %v1213 = vrot.slane %v1208, 7
        %v1214 = vrot.slane %v1213, 2
        %v1217 = vadd.f32 %v1205, %v1212
        %v1218 = vadd.f32 %v1206, %v1214
        %v1219 = vmul.f32 %v1217, -0.5
        %v1220 = vmul.f32 %v1218, -0.5
        %v1223 = vrot.slane %v1219, 1
        %v1224 = vrot.slane %v1219, 2
        %v1225 = vrot.slane %v1219, 3
        %v1226 = vrot.slane %v1220, 4
        %v1227 = vrot.slane %v1220, 5
        %v1228 = vrot.slane %v1220, 6
        %v1229 = vrot.slane %v1220, 7
        %vm1230 = vcmask 1040384
        %v1231 = vsel %vm1230, %v1219, %v1223
        %vm1232 = vcmask 1042434
        %v1233 = vsel %vm1232, %v1224, %v1225
        %v1234 = vsel %vm396, %v1231, %v1233
        %vm1235 = vcmask 1044484
        %v1236 = vsel %vm1235, %v1226, %v1227
        %vm1237 = vcmask 1046534
        %v1238 = vsel %vm1237, %v1228, %v1229
        %v1239 = vsel %vm736, %v1236, %v1238
        %v1240 = vsel %vm738, %v1234, %v1239
        %v1242 = vadd.f32 %v288, %v1240
        %1243 = vst [vmem:[%s281] sm:$0xff] %v1242
        %v1246 = vperm.slane %v1201, 1
        %v1247 = vperm.slane %v1201, 3
        %v1248 = vperm.slane %v1201, 5
        %v1249 = vperm.slane %v1201, 7
        %v1250 = vperm.slane %v1202, 1
        %v1251 = vperm.slane %v1202, 3
        %v1252 = vperm.slane %v1202, 5
        %v1253 = vperm.slane %v1202, 7
        %v1262 = vsel %vm1230, %v757, %v1246
        %v1263 = vsel %vm1230, %v758, %v1247
        %v1264 = vsel %vm1230, %v759, %v1248
        %v1265 = vsel %vm1230, %v760, %v1249
        %v1266 = vsel %vm1230, %v761, %v1250
        %v1267 = vsel %vm1230, %v762, %v1251
        %v1268 = vsel %vm1230, %v763, %v1252
        %v1269 = vsel %vm1230, %v764, %v1253
        %v1278 = vrot.slane %v1263, 6
        %v1279 = vrot.slane %v1264, 4
        %v1280 = vrot.slane %v1265, 2
        %v1281 = vrot.slane %v1267, 6
        %v1282 = vrot.slane %v1268, 4
        %v1283 = vrot.slane %v1269, 2
        %v1284 = vsel %vm396, %v1262, %v1278
        %v1285 = vsel %vm736, %v1279, %v1280
        %v1286 = vsel %vm738, %v1284, %v1285
        %v1287 = vsel %vm396, %v1266, %v1281
        %v1288 = vsel %vm736, %v1282, %v1283
        %v1289 = vsel %vm738, %v1287, %v1288
        %1292 = vst [vmem:[%s274] sm:$0xff] %v1286
        %1293 = vst [vmem:[%s274 + $0x8] sm:$0xff] %v1289
        %s1294 = sand.u32 %s109, 1
        %s1295 = scalar_lea.sflag [#allocation4], %s1294
        %s1296 = sand.u32 %s109, 1
        %s1297 = smul.addr %s1296, 16
        %s1298 = scalar_lea.vmem [#allocation8], %s1297
        %s1299 = sand.u32 %s135, 1
        %s1300 = scalar_lea.sflag [#allocation10], %s1299
        %s1301 = sand.u32 %s135, 1
        %s1302 = smul.addr %s1301, 8
        %s1303 = scalar_lea.vmem [#allocation9], %s1302
        // Predicated region
        $region45: #{tpu_custom_call.1} parent=31 // pred_check
          %p1304 = pneg %p119
        $region46: #{tpu_custom_call.1} parent=31 // pred_check_branch
          %1306 = sbr.rel (%p1304) target = $region48
        $region47: #{tpu_custom_call.1} parent=31 // pred_region
          %s1307 = smul.u32 8, %s28
          %1309 = vsyncadd %s1295, 0
          %s1310 = smul.addr %s1307, 2
          %s1311 = scalar_lea.hbm %s3, %s1310
          %s1313 = sshll.u32 %s1298, 4
          %s1314 = int_to_ptr.vmem [resolvable:$true] %s1313
          %s1315 = sshll.u32 %s1311, 4
          %s1316 = int_to_ptr.hbm [resolvable:$true] %s1315
          %1318 = dma.vmem_to_hbm [thread:$0]  %s1314, 256, %s1316, %s1295
        $region48: #{tpu_custom_call.1} parent=31 // pred_fallthru
          _
        // Predicated region
        $region49: #{tpu_custom_call.1} parent=31 // pred_check
          %p1319 = pneg %p145
        $region50: #{tpu_custom_call.1} parent=31 // pred_check_branch
          %1321 = sbr.rel (%p1319) target = $region52
        $region51: #{tpu_custom_call.1} parent=31 // pred_region
          %s1322 = smul.u32 8, %s28
          %1324 = vsyncadd %s1300, 0
          %s1325 = scalar_lea.hbm %s4, %s1322
          %s1327 = sshll.u32 %s1303, 4
          %s1328 = int_to_ptr.vmem [resolvable:$true] %s1327
          %s1329 = sshll.u32 %s1325, 4
          %s1330 = int_to_ptr.hbm [resolvable:$true] %s1329
          %1332 = dma.vmem_to_hbm [thread:$0]  %s1328, 128, %s1330, %s1300
        $region52: #{tpu_custom_call.1} parent=31 // pred_fallthru
          _
      $region32: #{tpu_custom_call.1} parent=5 // pred_fallthru
        _
      %p1333 = scmp.le.s32.totalorder 2, %s23
      // Predicated region
      $region53: #{tpu_custom_call.1} parent=5 // pred_check
        %p1334 = pneg %p1333
      $region54: #{tpu_custom_call.1} parent=5 // pred_check_branch
        %1336 = sbr.rel (%p1334) target = $region56
      $region55: #{tpu_custom_call.1} parent=5 // pred_region
        %s1337 = ssub.s32 %s23, 2
        // Predicated region
        $region57: #{tpu_custom_call.1} parent=55 // pred_check
          %p1338 = pneg %p125
        $region58: #{tpu_custom_call.1} parent=55 // pred_check_branch
          %1340 = sbr.rel (%p1338) target = $region60
        $region59: #{tpu_custom_call.1} parent=55 // pred_region
          %s1341 = sand.u32 %s110, 1
          %s1342 = scalar_lea.sflag [#allocation4], %s1341
          %s1343 = sand.u32 %s110, 1
          %s1344 = smul.addr %s1343, 16
          %s1345 = scalar_lea.vmem [#allocation8], %s1344
          %1347 = dma.done %s1342, 256
        $region60: #{tpu_custom_call.1} parent=55 // pred_fallthru
          _
        // Predicated region
        $region61: #{tpu_custom_call.1} parent=55 // pred_check
          %p1348 = pneg %p151
        $region62: #{tpu_custom_call.1} parent=55 // pred_check_branch
          %1350 = sbr.rel (%p1348) target = $region64
        $region63: #{tpu_custom_call.1} parent=55 // pred_region
          %s1351 = sand.u32 %s136, 1
          %s1352 = scalar_lea.sflag [#allocation10], %s1351
          %s1353 = sand.u32 %s136, 1
          %s1354 = smul.addr %s1353, 8
          %s1355 = scalar_lea.vmem [#allocation9], %s1354
          %1357 = dma.done %s1352, 128
        $region64: #{tpu_custom_call.1} parent=55 // pred_fallthru
          _
      $region56: #{tpu_custom_call.1} parent=5 // pred_fallthru
        _
    $region6: #{tpu_custom_call.1} parent=1 // loop_footer
      %s27 = sadd.s32 1, %s23
    $region7: #{tpu_custom_call.1} parent=1 // loop_footer_branch
      %22 = sbr.rel target = $region3
    $region8: #{tpu_custom_call.1} parent=1 // loop_exit
      _
    %1358 = vsyncpa [#allocation3], 1
    %s1359 = scalar_lea.sflag [#allocation3], 1
    %1360 = vsyncpa %s1359, 1
    %1361 = vsyncpa [#allocation6], 1
    %s1362 = scalar_lea.sflag [#allocation6], 1
    %1363 = vsyncpa %s1362, 1
    %1364 = vsyncpa [#allocation4], 1
    %s1365 = scalar_lea.sflag [#allocation4], 1
    %1366 = vsyncpa %s1365, 1
    %1367 = vsyncpa [#allocation10], 1
    %s1368 = scalar_lea.sflag [#allocation10], 1
    %1369 = vsyncpa %s1368, 1

</llo_original>
